<compile_context>
chip_gen: v7x
topology: tpu7x:2x2x1
jax: 0.10.0
libtpu: 0.0.40
codegen_flags: <defaults>
</compile_context>

<pallas_src>
import functools

import jax
import jax.numpy as jnp
from jax import lax
from jax.experimental import pallas as pl
from jax.experimental.pallas import tpu as pltpu

EPS = 1e-5

# bf16 MXU operands (f32 accumulation) on real TPUs; f32 elsewhere (the CPU
# interpret runtime does not implement BF16 x BF16 = F32 dots).
_ON_TPU = jax.default_backend() == "tpu"
_MXU_DTYPE = jnp.bfloat16 if _ON_TPU else jnp.float32

# Below this channel count use the fused (Cout,9C)x(9C,R) im2col matmul;
# at/above it use per-tap accumulation (no (9C,R) buffer, K=C fills the MXU).
_IM2COL_MAX_C = 128


def basic_block_kernel(x_ref, mask_ref, w1_ref, w2_ref, ws_ref, bias_ref,
                       out_ref, *, nb, hh, ww, cin, cout):
    """One chunk of `nb` batch elements per grid step.

    x_ref    : (Cin,  nb*hh*ww)  MXU dtype  input, channel-major, pixels flat
    mask_ref : (9,    nb*hh*ww)  MXU dtype  0/1 border-validity per 3x3 tap
    w1_ref   : (Cout, 9*Cin)     MXU dtype  conv1 weights, BN scale folded in
    w2_ref   : (Cout, 9*Cout)    MXU dtype  conv2 weights, BN scale folded in
    ws_ref   : (Cout, Cin)       MXU dtype  shortcut 1x1 weights, scale folded
    bias_ref : (Cout, 3)         f32        packed BN biases (b1 | b2 | bs)
    out_ref  : (Cout, nb*hh*ww)  f32        lane-dense output block
    """
    del nb  # block extent is carried by the shapes

    xv = x_ref[...]                                   # (Cin, R)  MXU dtype
    mk = mask_ref[...]                                # (9,  R)   0/1
    bvec = bias_ref[...]                              # (Cout, 3) f32

    offsets = [(dh, dw) for dh in (-1, 0, 1) for dw in (-1, 0, 1)]

    def tap(v, t):
        """Shifted + border-masked 3x3 tap t of v, in the MXU dtype."""
        dh, dw = offsets[t]
        s = dh * ww + dw
        if s == 0:
            return v                                  # center tap: as-is
        # Flat-pixel shift; mask kills out-of-image / wrapped columns.
        return jnp.roll(v, -s, axis=1) * mk[t:t + 1, :]

    def conv3x3(v, w_ref, c):
        if c < _IM2COL_MAX_C:
            # Small C: one MXU matmul on the stacked taps (fills the K dim).
            p = jnp.concatenate([tap(v, t) for t in range(9)], axis=0)
            return jnp.dot(w_ref[...], p, preferred_element_type=jnp.float32)
        # Large C: per-tap accumulation, never materializes the (9C, R) buffer.
        acc = jnp.dot(w_ref[:, 0:c], tap(v, 0),
                      preferred_element_type=jnp.float32)
        for t in range(1, 9):
            acc += jnp.dot(w_ref[:, t * c:(t + 1) * c], tap(v, t),
                           preferred_element_type=jnp.float32)
        return acc

    # ---- conv1 (3x3, s=1, p=1) + folded BN + ReLU ----
    y1 = jnp.maximum(conv3x3(xv, w1_ref, cin) + bvec[:, 0:1], 0.0)
    y1 = y1.astype(xv.dtype)                          # single cast before conv2

    # ---- conv2 (3x3, s=1, p=1) + folded BN ----
    y2 = conv3x3(y1, w2_ref, cout) + bvec[:, 1:2]

    # ---- shortcut 1x1 conv + folded BN (reuses the unshifted center tap) ----
    sc = jnp.dot(ws_ref[...], xv, preferred_element_type=jnp.float32)
    sc = sc + bvec[:, 2:3]

    # ---- residual add + final ReLU; unmasked lane-dense store ----
    out_ref[...] = jnp.maximum(y2 + sc, 0.0).astype(out_ref.dtype)


def fold_bn(gamma, beta, mean, var):
    scale = gamma / jnp.sqrt(var + EPS)
    bias = beta - mean * scale
    return scale, bias


def _estimate_vmem_bytes(nb, hw, cin, cout, act_bytes):
    """Rough per-step VMEM footprint (double-buffered I/O + live values)."""
    r = nb * hw
    io = 2 * r * (cin * act_bytes + cout * 4)          # x / out blocks, x2 buf
    mask = 9 * r * act_bytes                           # resident border masks
    wts = 2 * act_bytes * (cout * 9 * cin + cout * 9 * cout + cout * cin)
    im2col = r * max(9 * cin * act_bytes if cin < _IM2COL_MAX_C else 0,
                     9 * cout * act_bytes if cout < _IM2COL_MAX_C else 0)
    live = im2col + r * (cout * act_bytes + 3 * cout * 4)   # y1(bf16)+y1/y2/sc
    return io + mask + wts + live


def _choose_nb(n, hw, cin, cout, act_bytes, budget_bytes=24 << 20):
    """Largest batch-chunk divisor of n fitting the VMEM budget, preferring
    >= 2 grid steps (v7x megacore) and 128-lane-aligned blocks."""
    divisors = [d for d in range(1, n + 1) if n % d == 0]
    fits = [d for d in divisors
            if _estimate_vmem_bytes(d, hw, cin, cout, act_bytes) <= budget_bytes]
    if not fits:
        fits = [1]
    pool = [d for d in fits if d < n] or fits          # keep grid >= 2 if we can
    aligned = [d for d in pool if (d * hw) % 128 == 0] or pool
    return max(aligned)


@jax.jit
def basic_block_pallas(x_nhwc, params):
    # TODO(synk): stride=[1,1] (the module default) with projection shortcut is
    # implemented; stride=2 downsample / identity-shortcut variants are not.
    N, H, W, Cin = x_nhwc.shape
    Cout = params["w1"].shape[-1]
    HW = H * W
    R = N * HW
    act_bytes = jnp.dtype(_MXU_DTYPE).itemsize
    NB = _choose_nb(N, HW, Cin, Cout, act_bytes)

    # Fold BatchNorm (eval mode) into per-channel scale/bias, then fold the
    # scale into the conv weights (commutes with the matmul) so only the bias
    # add remains in-kernel.  Biases are packed into one (Cout, 3) block.
    s1, b1 = fold_bn(params["g1"], params["be1"], params["m1"], params["v1"])
    s2, b2 = fold_bn(params["g2"], params["be2"], params["m2"], params["v2"])
    ss, bs = fold_bn(params["gs"], params["bes"], params["ms"], params["vs"])
    w1f = (params["w1"].reshape(9 * Cin, Cout).T * s1[:, None]).astype(_MXU_DTYPE)
    w2f = (params["w2"].reshape(9 * Cout, Cout).T * s2[:, None]).astype(_MXU_DTYPE)
    wsf = (params["ws"].T * ss[:, None]).astype(_MXU_DTYPE)
    bias = jnp.stack([b1, b2, bs], axis=1).astype(jnp.float32)     # (Cout, 3)

    # Layout plumbing only: channel-major flattened pixels, pre-cast to the
    # MXU operand dtype (the kernel only ever feeds x into the MXU).
    xT = x_nhwc.reshape(R, Cin).T.astype(_MXU_DTYPE)               # (Cin, R)

    # 3x3 tap border masks for one NB*H*W block (identical for every grid
    # step) — hoisted out of the kernel, DMA'd once via a constant index_map.
    col = jnp.arange(NB * HW, dtype=jnp.int32)
    hp = (col // W) % H
    wp = col % W
    mask = jnp.stack(
        [(hp + dh >= 0) & (hp + dh < H) & (wp + dw >= 0) & (wp + dw < W)
         for dh in (-1, 0, 1) for dw in (-1, 0, 1)],
        axis=0).astype(_MXU_DTYPE)                                 # (9, NB*HW)

    kernel = functools.partial(basic_block_kernel, nb=NB, hh=H, ww=W,
                               cin=Cin, cout=Cout)

    est = _estimate_vmem_bytes(NB, HW, Cin, Cout, act_bytes)
    vmem_limit = int(min(64 << 20, max(32 << 20, 2 * est)))

    outT = pl.pallas_call(
        kernel,
        out_shape=jax.ShapeDtypeStruct((Cout, R), x_nhwc.dtype),
        grid_spec=pltpu.PrefetchScalarGridSpec(
            num_scalar_prefetch=0,
            grid=(N // NB,),
            in_specs=[
                pl.BlockSpec((Cin, NB * HW), lambda i: (0, i)),     # x
                pl.BlockSpec((9, NB * HW), lambda i: (0, 0)),       # masks
                pl.BlockSpec((Cout, 9 * Cin), lambda i: (0, 0)),    # w1 (folded)
                pl.BlockSpec((Cout, 9 * Cout), lambda i: (0, 0)),   # w2 (folded)
                pl.BlockSpec((Cout, Cin), lambda i: (0, 0)),        # ws (folded)
                pl.BlockSpec((Cout, 3), lambda i: (0, 0)),          # packed bias
            ],
            out_specs=pl.BlockSpec((Cout, NB * HW), lambda i: (0, i)),
        ),
        compiler_params=pltpu.CompilerParams(
            dimension_semantics=("parallel",),
            vmem_limit_bytes=vmem_limit),
    )(xT, mask, w1f, w2f, wsf, bias)

    return outT.T.reshape(N, H, W, Cout)


def basic_block_reference(x_nhwc, params):
    """Pure-JAX reference (NHWC) matching the PyTorch forward in eval mode."""
    dn = ("NHWC", "HWIO", "NHWC")
    s1, b1 = fold_bn(params["g1"], params["be1"], params["m1"], params["v1"])
    s2, b2 = fold_bn(params["g2"], params["be2"], params["m2"], params["v2"])
    ss, bs = fold_bn(params["gs"], params["bes"], params["ms"], params["vs"])

    y = lax.conv_general_dilated(x_nhwc, params["w1"], (1, 1),
                                 ((1, 1), (1, 1)), dimension_numbers=dn)
    y = jnp.maximum(y * s1 + b1, 0.0)
    y = lax.conv_general_dilated(y, params["w2"], (1, 1),
                                 ((1, 1), (1, 1)), dimension_numbers=dn)
    y = y * s2 + b2
    sc = lax.conv_general_dilated(
        x_nhwc, params["ws"].reshape(1, 1, *params["ws"].shape), (1, 1),
        ((0, 0), (0, 0)), dimension_numbers=dn)
    sc = sc * ss + bs
    return jnp.maximum(y + sc, 0.0)


def init_params(key, cin, cout):
    ks = jax.random.split(key, 9)
    return {
        # conv weights in HWIO layout
        "w1": jax.random.normal(ks[0], (3, 3, cin, cout), jnp.float32) * 0.1,
        "w2": jax.random.normal(ks[1], (3, 3, cout, cout), jnp.float32) * 0.1,
        "ws": jax.random.normal(ks[2], (cin, cout), jnp.float32) * 0.1,
        # BatchNorm params (eval mode: gamma/beta + running mean/var)
        "g1": jax.random.normal(ks[3], (cout,), jnp.float32) * 0.1 + 1.0,
        "be1": jax.random.normal(ks[4], (cout,), jnp.float32) * 0.1,
        "m1": jax.random.normal(ks[5], (cout,), jnp.float32) * 0.05,
        "v1": jnp.abs(jax.random.normal(ks[6], (cout,), jnp.float32)) * 0.1 + 1.0,
        "g2": jnp.ones((cout,), jnp.float32) * 0.9,
        "be2": jnp.ones((cout,), jnp.float32) * 0.05,
        "m2": jnp.zeros((cout,), jnp.float32),
        "v2": jnp.ones((cout,), jnp.float32),
        "gs": jnp.ones((cout,), jnp.float32) * 1.1,
        "bes": jnp.zeros((cout,), jnp.float32),
        "ms": jax.random.normal(ks[7], (cout,), jnp.float32) * 0.05,
        "vs": jnp.abs(jax.random.normal(ks[8], (cout,), jnp.float32)) * 0.1 + 1.0,
    }


if __name__ == "__main__":
    key = jax.random.PRNGKey(0)
    k_x, k_p = jax.random.split(key)

    N, Cin, H, W, Cout = 2, 4, 16, 16, 8
    # PyTorch-style NCHW input, converted to NHWC for the wrapper.
    x_nchw = jax.random.normal(k_x, (N, Cin, H, W), jnp.float32)
    x_nhwc = jnp.transpose(x_nchw, (0, 2, 3, 1))

    params = init_params(k_p, Cin, Cout)

    out = jax.block_until_ready(basic_block_pallas(x_nhwc, params))
    ref = jax.block_until_ready(basic_block_reference(x_nhwc, params))

    assert out.shape == (N, H, W, Cout)
    max_err = float(jnp.max(jnp.abs(out - ref)))
    assert jnp.allclose(out, ref, rtol=2e-2, atol=2e-2), max_err

    print("KERNEL_OK")
</pallas_src>

<mosaic_0001>
module attributes {stable_mosaic.version = 11 : i64} {
  func.func @basic_block_kernel(%arg0: i32, %arg1: memref<4x256xf32, #tpu.memory_space<vmem>>, %arg2: memref<9x256xf32, #tpu.memory_space<vmem>>, %arg3: memref<8x36xf32, #tpu.memory_space<vmem>>, %arg4: memref<8x72xf32, #tpu.memory_space<vmem>>, %arg5: memref<8x4xf32, #tpu.memory_space<vmem>>, %arg6: memref<8x3xf32, #tpu.memory_space<vmem>>, %arg7: memref<8x256xf32, #tpu.memory_space<vmem>>) attributes {dimension_semantics = [#tpu.dimension_semantics<parallel>], iteration_bounds = array<i64: 2>, scalar_prefetch = 0 : i64, scratch_operands = 0 : i64, tpu.core_type = #tpu.core_type<tc>, window_params = [{transform_indices = @transform_0, window_bounds = array<i64: 4, 256>}, {pipeline_mode = #tpu.pipeline_mode<synchronous>, transform_indices = @transform_1, window_bounds = array<i64: 9, 256>}, {pipeline_mode = #tpu.pipeline_mode<synchronous>, transform_indices = @transform_2, window_bounds = array<i64: 8, 36>}, {pipeline_mode = #tpu.pipeline_mode<synchronous>, transform_indices = @transform_3, window_bounds = array<i64: 8, 72>}, {pipeline_mode = #tpu.pipeline_mode<synchronous>, transform_indices = @transform_4, window_bounds = array<i64: 8, 4>}, {pipeline_mode = #tpu.pipeline_mode<synchronous>, transform_indices = @transform_5, window_bounds = array<i64: 8, 3>}, {transform_indices = @transform_6, window_bounds = array<i64: 8, 256>}]} {
    %c0 = arith.constant 0 : index
    %c0_0 = arith.constant 0 : index
    %0 = vector.load %arg1[%c0, %c0_0] : memref<4x256xf32, #tpu.memory_space<vmem>>, vector<4x256xf32>
    %c0_1 = arith.constant 0 : index
    %c0_2 = arith.constant 0 : index
    %1 = vector.load %arg2[%c0_1, %c0_2] : memref<9x256xf32, #tpu.memory_space<vmem>>, vector<9x256xf32>
    %c0_3 = arith.constant 0 : index
    %c0_4 = arith.constant 0 : index
    %2 = vector.load %arg6[%c0_3, %c0_4] : memref<8x3xf32, #tpu.memory_space<vmem>>, vector<8x3xf32>
    %3 = vector.extract_strided_slice %0 {offsets = [0, 239], sizes = [4, 17], strides = [1, 1]} : vector<4x256xf32> to vector<4x17xf32>
    %4 = vector.extract_strided_slice %0 {offsets = [0, 0], sizes = [4, 239], strides = [1, 1]} : vector<4x256xf32> to vector<4x239xf32>
    %5 = tpu.concatenate %3, %4 in 1 : vector<4x17xf32>, vector<4x239xf32> -> vector<4x256xf32>
    %6 = vector.extract_strided_slice %1 {offsets = [0, 0], sizes = [1, 256], strides = [1, 1]} : vector<9x256xf32> to vector<1x256xf32>
    %7 = vector.broadcast %6 : vector<1x256xf32> to vector<4x256xf32>
    %8 = arith.mulf %5, %7 : vector<4x256xf32>
    %9 = vector.extract_strided_slice %0 {offsets = [0, 240], sizes = [4, 16], strides = [1, 1]} : vector<4x256xf32> to vector<4x16xf32>
    %10 = vector.extract_strided_slice %0 {offsets = [0, 0], sizes = [4, 240], strides = [1, 1]} : vector<4x256xf32> to vector<4x240xf32>
    %11 = tpu.concatenate %9, %10 in 1 : vector<4x16xf32>, vector<4x240xf32> -> vector<4x256xf32>
    %12 = vector.extract_strided_slice %1 {offsets = [1, 0], sizes = [1, 256], strides = [1, 1]} : vector<9x256xf32> to vector<1x256xf32>
    %13 = vector.broadcast %12 : vector<1x256xf32> to vector<4x256xf32>
    %14 = arith.mulf %11, %13 : vector<4x256xf32>
    %15 = vector.extract_strided_slice %0 {offsets = [0, 241], sizes = [4, 15], strides = [1, 1]} : vector<4x256xf32> to vector<4x15xf32>
    %16 = vector.extract_strided_slice %0 {offsets = [0, 0], sizes = [4, 241], strides = [1, 1]} : vector<4x256xf32> to vector<4x241xf32>
    %17 = tpu.concatenate %15, %16 in 1 : vector<4x15xf32>, vector<4x241xf32> -> vector<4x256xf32>
    %18 = vector.extract_strided_slice %1 {offsets = [2, 0], sizes = [1, 256], strides = [1, 1]} : vector<9x256xf32> to vector<1x256xf32>
    %19 = vector.broadcast %18 : vector<1x256xf32> to vector<4x256xf32>
    %20 = arith.mulf %17, %19 : vector<4x256xf32>
    %21 = vector.extract_strided_slice %0 {offsets = [0, 255], sizes = [4, 1], strides = [1, 1]} : vector<4x256xf32> to vector<4x1xf32>
    %22 = vector.extract_strided_slice %0 {offsets = [0, 0], sizes = [4, 255], strides = [1, 1]} : vector<4x256xf32> to vector<4x255xf32>
    %23 = tpu.concatenate %21, %22 in 1 : vector<4x1xf32>, vector<4x255xf32> -> vector<4x256xf32>
    %24 = vector.extract_strided_slice %1 {offsets = [3, 0], sizes = [1, 256], strides = [1, 1]} : vector<9x256xf32> to vector<1x256xf32>
    %25 = vector.broadcast %24 : vector<1x256xf32> to vector<4x256xf32>
    %26 = arith.mulf %23, %25 : vector<4x256xf32>
    %27 = vector.extract_strided_slice %0 {offsets = [0, 1], sizes = [4, 255], strides = [1, 1]} : vector<4x256xf32> to vector<4x255xf32>
    %28 = vector.extract_strided_slice %0 {offsets = [0, 0], sizes = [4, 1], strides = [1, 1]} : vector<4x256xf32> to vector<4x1xf32>
    %29 = tpu.concatenate %27, %28 in 1 : vector<4x255xf32>, vector<4x1xf32> -> vector<4x256xf32>
    %30 = vector.extract_strided_slice %1 {offsets = [5, 0], sizes = [1, 256], strides = [1, 1]} : vector<9x256xf32> to vector<1x256xf32>
    %31 = vector.broadcast %30 : vector<1x256xf32> to vector<4x256xf32>
    %32 = arith.mulf %29, %31 : vector<4x256xf32>
    %33 = vector.extract_strided_slice %0 {offsets = [0, 15], sizes = [4, 241], strides = [1, 1]} : vector<4x256xf32> to vector<4x241xf32>
    %34 = vector.extract_strided_slice %0 {offsets = [0, 0], sizes = [4, 15], strides = [1, 1]} : vector<4x256xf32> to vector<4x15xf32>
    %35 = tpu.concatenate %33, %34 in 1 : vector<4x241xf32>, vector<4x15xf32> -> vector<4x256xf32>
    %36 = vector.extract_strided_slice %1 {offsets = [6, 0], sizes = [1, 256], strides = [1, 1]} : vector<9x256xf32> to vector<1x256xf32>
    %37 = vector.broadcast %36 : vector<1x256xf32> to vector<4x256xf32>
    %38 = arith.mulf %35, %37 : vector<4x256xf32>
    %39 = vector.extract_strided_slice %0 {offsets = [0, 16], sizes = [4, 240], strides = [1, 1]} : vector<4x256xf32> to vector<4x240xf32>
    %40 = vector.extract_strided_slice %0 {offsets = [0, 0], sizes = [4, 16], strides = [1, 1]} : vector<4x256xf32> to vector<4x16xf32>
    %41 = tpu.concatenate %39, %40 in 1 : vector<4x240xf32>, vector<4x16xf32> -> vector<4x256xf32>
    %42 = vector.extract_strided_slice %1 {offsets = [7, 0], sizes = [1, 256], strides = [1, 1]} : vector<9x256xf32> to vector<1x256xf32>
    %43 = vector.broadcast %42 : vector<1x256xf32> to vector<4x256xf32>
    %44 = arith.mulf %41, %43 : vector<4x256xf32>
    %45 = vector.extract_strided_slice %0 {offsets = [0, 17], sizes = [4, 239], strides = [1, 1]} : vector<4x256xf32> to vector<4x239xf32>
    %46 = vector.extract_strided_slice %0 {offsets = [0, 0], sizes = [4, 17], strides = [1, 1]} : vector<4x256xf32> to vector<4x17xf32>
    %47 = tpu.concatenate %45, %46 in 1 : vector<4x239xf32>, vector<4x17xf32> -> vector<4x256xf32>
    %48 = vector.extract_strided_slice %1 {offsets = [8, 0], sizes = [1, 256], strides = [1, 1]} : vector<9x256xf32> to vector<1x256xf32>
    %49 = vector.broadcast %48 : vector<1x256xf32> to vector<4x256xf32>
    %50 = arith.mulf %47, %49 : vector<4x256xf32>
    %51 = tpu.concatenate %8, %14, %20, %26, %0, %32, %38, %44, %50 in 0 : vector<4x256xf32>, vector<4x256xf32>, vector<4x256xf32>, vector<4x256xf32>, vector<4x256xf32>, vector<4x256xf32>, vector<4x256xf32>, vector<4x256xf32>, vector<4x256xf32> -> vector<36x256xf32>
    %c0_5 = arith.constant 0 : index
    %c0_6 = arith.constant 0 : index
    %52 = vector.load %arg3[%c0_5, %c0_6] : memref<8x36xf32, #tpu.memory_space<vmem>>, vector<8x36xf32>
    %cst = arith.constant dense<0.000000e+00> : vector<8x256xf32>
    %53 = tpu.matmul %52, %51, %cst {dimension_numbers = #tpu.dot_dimension_numbers<[1], [0], [0], [1], [0, 0, 1, 1], [], []>} : vector<8x36xf32>, vector<36x256xf32>, vector<8x256xf32> -> vector<8x256xf32>
    %54 = vector.extract_strided_slice %2 {offsets = [0, 0], sizes = [8, 1], strides = [1, 1]} : vector<8x3xf32> to vector<8x1xf32>
    %55 = vector.broadcast %54 : vector<8x1xf32> to vector<8x256xf32>
    %56 = arith.addf %53, %55 : vector<8x256xf32>
    %cst_7 = arith.constant 0.000000e+00 : f32
    %57 = vector.broadcast %cst_7 : f32 to vector<8x256xf32>
    %58 = arith.maximumf %56, %57 : vector<8x256xf32>
    %59 = vector.extract_strided_slice %58 {offsets = [0, 239], sizes = [8, 17], strides = [1, 1]} : vector<8x256xf32> to vector<8x17xf32>
    %60 = vector.extract_strided_slice %58 {offsets = [0, 0], sizes = [8, 239], strides = [1, 1]} : vector<8x256xf32> to vector<8x239xf32>
    %61 = tpu.concatenate %59, %60 in 1 : vector<8x17xf32>, vector<8x239xf32> -> vector<8x256xf32>
    %62 = vector.extract_strided_slice %1 {offsets = [0, 0], sizes = [1, 256], strides = [1, 1]} : vector<9x256xf32> to vector<1x256xf32>
    %63 = vector.broadcast %62 : vector<1x256xf32> to vector<8x256xf32>
    %64 = arith.mulf %61, %63 : vector<8x256xf32>
    %65 = vector.extract_strided_slice %58 {offsets = [0, 240], sizes = [8, 16], strides = [1, 1]} : vector<8x256xf32> to vector<8x16xf32>
    %66 = vector.extract_strided_slice %58 {offsets = [0, 0], sizes = [8, 240], strides = [1, 1]} : vector<8x256xf32> to vector<8x240xf32>
    %67 = tpu.concatenate %65, %66 in 1 : vector<8x16xf32>, vector<8x240xf32> -> vector<8x256xf32>
    %68 = vector.extract_strided_slice %1 {offsets = [1, 0], sizes = [1, 256], strides = [1, 1]} : vector<9x256xf32> to vector<1x256xf32>
    %69 = vector.broadcast %68 : vector<1x256xf32> to vector<8x256xf32>
    %70 = arith.mulf %67, %69 : vector<8x256xf32>
    %71 = vector.extract_strided_slice %58 {offsets = [0, 241], sizes = [8, 15], strides = [1, 1]} : vector<8x256xf32> to vector<8x15xf32>
    %72 = vector.extract_strided_slice %58 {offsets = [0, 0], sizes = [8, 241], strides = [1, 1]} : vector<8x256xf32> to vector<8x241xf32>
    %73 = tpu.concatenate %71, %72 in 1 : vector<8x15xf32>, vector<8x241xf32> -> vector<8x256xf32>
    %74 = vector.extract_strided_slice %1 {offsets = [2, 0], sizes = [1, 256], strides = [1, 1]} : vector<9x256xf32> to vector<1x256xf32>
    %75 = vector.broadcast %74 : vector<1x256xf32> to vector<8x256xf32>
    %76 = arith.mulf %73, %75 : vector<8x256xf32>
    %77 = vector.extract_strided_slice %58 {offsets = [0, 255], sizes = [8, 1], strides = [1, 1]} : vector<8x256xf32> to vector<8x1xf32>
    %78 = vector.extract_strided_slice %58 {offsets = [0, 0], sizes = [8, 255], strides = [1, 1]} : vector<8x256xf32> to vector<8x255xf32>
    %79 = tpu.concatenate %77, %78 in 1 : vector<8x1xf32>, vector<8x255xf32> -> vector<8x256xf32>
    %80 = vector.extract_strided_slice %1 {offsets = [3, 0], sizes = [1, 256], strides = [1, 1]} : vector<9x256xf32> to vector<1x256xf32>
    %81 = vector.broadcast %80 : vector<1x256xf32> to vector<8x256xf32>
    %82 = arith.mulf %79, %81 : vector<8x256xf32>
    %83 = vector.extract_strided_slice %58 {offsets = [0, 1], sizes = [8, 255], strides = [1, 1]} : vector<8x256xf32> to vector<8x255xf32>
    %84 = vector.extract_strided_slice %58 {offsets = [0, 0], sizes = [8, 1], strides = [1, 1]} : vector<8x256xf32> to vector<8x1xf32>
    %85 = tpu.concatenate %83, %84 in 1 : vector<8x255xf32>, vector<8x1xf32> -> vector<8x256xf32>
    %86 = vector.extract_strided_slice %1 {offsets = [5, 0], sizes = [1, 256], strides = [1, 1]} : vector<9x256xf32> to vector<1x256xf32>
    %87 = vector.broadcast %86 : vector<1x256xf32> to vector<8x256xf32>
    %88 = arith.mulf %85, %87 : vector<8x256xf32>
    %89 = vector.extract_strided_slice %58 {offsets = [0, 15], sizes = [8, 241], strides = [1, 1]} : vector<8x256xf32> to vector<8x241xf32>
    %90 = vector.extract_strided_slice %58 {offsets = [0, 0], sizes = [8, 15], strides = [1, 1]} : vector<8x256xf32> to vector<8x15xf32>
    %91 = tpu.concatenate %89, %90 in 1 : vector<8x241xf32>, vector<8x15xf32> -> vector<8x256xf32>
    %92 = vector.extract_strided_slice %1 {offsets = [6, 0], sizes = [1, 256], strides = [1, 1]} : vector<9x256xf32> to vector<1x256xf32>
    %93 = vector.broadcast %92 : vector<1x256xf32> to vector<8x256xf32>
    %94 = arith.mulf %91, %93 : vector<8x256xf32>
    %95 = vector.extract_strided_slice %58 {offsets = [0, 16], sizes = [8, 240], strides = [1, 1]} : vector<8x256xf32> to vector<8x240xf32>
    %96 = vector.extract_strided_slice %58 {offsets = [0, 0], sizes = [8, 16], strides = [1, 1]} : vector<8x256xf32> to vector<8x16xf32>
    %97 = tpu.concatenate %95, %96 in 1 : vector<8x240xf32>, vector<8x16xf32> -> vector<8x256xf32>
    %98 = vector.extract_strided_slice %1 {offsets = [7, 0], sizes = [1, 256], strides = [1, 1]} : vector<9x256xf32> to vector<1x256xf32>
    %99 = vector.broadcast %98 : vector<1x256xf32> to vector<8x256xf32>
    %100 = arith.mulf %97, %99 : vector<8x256xf32>
    %101 = vector.extract_strided_slice %58 {offsets = [0, 17], sizes = [8, 239], strides = [1, 1]} : vector<8x256xf32> to vector<8x239xf32>
    %102 = vector.extract_strided_slice %58 {offsets = [0, 0], sizes = [8, 17], strides = [1, 1]} : vector<8x256xf32> to vector<8x17xf32>
    %103 = tpu.concatenate %101, %102 in 1 : vector<8x239xf32>, vector<8x17xf32> -> vector<8x256xf32>
    %104 = vector.extract_strided_slice %1 {offsets = [8, 0], sizes = [1, 256], strides = [1, 1]} : vector<9x256xf32> to vector<1x256xf32>
    %105 = vector.broadcast %104 : vector<1x256xf32> to vector<8x256xf32>
    %106 = arith.mulf %103, %105 : vector<8x256xf32>
    %107 = tpu.concatenate %64, %70, %76, %82, %58, %88, %94, %100, %106 in 0 : vector<8x256xf32>, vector<8x256xf32>, vector<8x256xf32>, vector<8x256xf32>, vector<8x256xf32>, vector<8x256xf32>, vector<8x256xf32>, vector<8x256xf32>, vector<8x256xf32> -> vector<72x256xf32>
    %c0_8 = arith.constant 0 : index
    %c0_9 = arith.constant 0 : index
    %108 = vector.load %arg4[%c0_8, %c0_9] : memref<8x72xf32, #tpu.memory_space<vmem>>, vector<8x72xf32>
    %cst_10 = arith.constant dense<0.000000e+00> : vector<8x256xf32>
    %109 = tpu.matmul %108, %107, %cst_10 {dimension_numbers = #tpu.dot_dimension_numbers<[1], [0], [0], [1], [0, 0, 1, 1], [], []>} : vector<8x72xf32>, vector<72x256xf32>, vector<8x256xf32> -> vector<8x256xf32>
    %110 = vector.extract_strided_slice %2 {offsets = [0, 1], sizes = [8, 1], strides = [1, 1]} : vector<8x3xf32> to vector<8x1xf32>
    %111 = vector.broadcast %110 : vector<8x1xf32> to vector<8x256xf32>
    %112 = arith.addf %109, %111 : vector<8x256xf32>
    %c0_11 = arith.constant 0 : index
    %c0_12 = arith.constant 0 : index
    %113 = vector.load %arg5[%c0_11, %c0_12] : memref<8x4xf32, #tpu.memory_space<vmem>>, vector<8x4xf32>
    %cst_13 = arith.constant dense<0.000000e+00> : vector<8x256xf32>
    %114 = tpu.matmul %113, %0, %cst_13 {dimension_numbers = #tpu.dot_dimension_numbers<[1], [0], [0], [1], [0, 0, 1, 1], [], []>} : vector<8x4xf32>, vector<4x256xf32>, vector<8x256xf32> -> vector<8x256xf32>
    %115 = vector.extract_strided_slice %2 {offsets = [0, 2], sizes = [8, 1], strides = [1, 1]} : vector<8x3xf32> to vector<8x1xf32>
    %116 = vector.broadcast %115 : vector<8x1xf32> to vector<8x256xf32>
    %117 = arith.addf %114, %116 : vector<8x256xf32>
    %118 = arith.addf %112, %117 : vector<8x256xf32>
    %cst_14 = arith.constant 0.000000e+00 : f32
    %119 = vector.broadcast %cst_14 : f32 to vector<8x256xf32>
    %120 = arith.maximumf %118, %119 : vector<8x256xf32>
    %c0_15 = arith.constant 0 : index
    %c0_16 = arith.constant 0 : index
    %121 = vector.load %arg7[%c0_15, %c0_16] : memref<8x256xf32, #tpu.memory_space<vmem>>, vector<8x256xf32>
    tpu.vector_store %arg7[%c0_15, %c0_16], %120 {strides = array<i32>} : memref<8x256xf32, #tpu.memory_space<vmem>>, vector<8x256xf32>,
    return
  }
  func.func @transform_0(%arg0: i32) -> (i32, i32) {
    %c0_i32 = arith.constant 0 : i32
    %c0_i32_0 = arith.constant 0 : i32
    return %c0_i32, %arg0 : i32, i32
  }
  func.func @transform_1(%arg0: i32) -> (i32, i32) {
    %c0_i32 = arith.constant 0 : i32
    %c0_i32_0 = arith.constant 0 : i32
    %c0_i32_1 = arith.constant 0 : i32
    return %c0_i32, %c0_i32_0 : i32, i32
  }
  func.func @transform_2(%arg0: i32) -> (i32, i32) {
    %c0_i32 = arith.constant 0 : i32
    %c0_i32_0 = arith.constant 0 : i32
    %c0_i32_1 = arith.constant 0 : i32
    return %c0_i32, %c0_i32_0 : i32, i32
  }
  func.func @transform_3(%arg0: i32) -> (i32, i32) {
    %c0_i32 = arith.constant 0 : i32
    %c0_i32_0 = arith.constant 0 : i32
    %c0_i32_1 = arith.constant 0 : i32
    return %c0_i32, %c0_i32_0 : i32, i32
  }
  func.func @transform_4(%arg0: i32) -> (i32, i32) {
    %c0_i32 = arith.constant 0 : i32
    %c0_i32_0 = arith.constant 0 : i32
    %c0_i32_1 = arith.constant 0 : i32
    return %c0_i32, %c0_i32_0 : i32, i32
  }
  func.func @transform_5(%arg0: i32) -> (i32, i32) {
    %c0_i32 = arith.constant 0 : i32
    %c0_i32_0 = arith.constant 0 : i32
    %c0_i32_1 = arith.constant 0 : i32
    return %c0_i32, %c0_i32_0 : i32, i32
  }
  func.func @transform_6(%arg0: i32) -> (i32, i32) {
    %c0_i32 = arith.constant 0 : i32
    %c0_i32_0 = arith.constant 0 : i32
    return %c0_i32, %arg0 : i32, i32
  }
}

</mosaic_0001>

<llo_original>
// kernel: basic_block_pallas.1
$region0: #{basic_block_pallas.1}
  #allocation0 [shape = 'u32[]', space=smem, size = 0x4, offset = 0x4, fixed_abs, tag = 'smem constant byte address 0x4 - core index']
  #allocation1 [shape = 'u32[144,128]{1,0:T(1,128)}', space=vmem, size = 0x12000, scoped, tag = 'internal scratch']
  %s0 = inlined_call_operand.vmem [shape: f32[4,512], index: 0, kind: input, shape index: {}]
  %s1 = inlined_call_operand.vmem [shape: f32[9,256], index: 1, kind: input, shape index: {}]
  %s2 = inlined_call_operand.vmem [shape: f32[8,36], index: 2, kind: input, shape index: {}]
  %s3 = inlined_call_operand.vmem [shape: f32[8,72], index: 3, kind: input, shape index: {}]
  %s4 = inlined_call_operand.vmem [shape: f32[8,4], index: 4, kind: input, shape index: {}]
  %s5 = inlined_call_operand.vmem [shape: f32[8,3], index: 5, kind: input, shape index: {}]
  %s6 = inlined_call_operand.vmem [shape: f32[8,512], index: 6, kind: output, shape index: {}]
  %s7 = sld [smem:[#allocation0]]
  $region57: #{basic_block_pallas.1} parent=0
    _
  %s9 = ssub.s32 1, %s7
  %s10 = scalar_select 0, %s9, %s7
  loop: start=0, step=1, limit=4
  $region2: #{basic_block_pallas.1} parent=0 // loop_pre_header
    _
  $region3: #{basic_block_pallas.1} parent=0 // loop_header
    %s12 = sphi 0, %s16
    %p13 = scmp.ge.s32.totalorder %s12, 4
    %s22 = sphi 0, %s24
    %s25 = sphi 0, %s22
    %s26 = sphi 0, %s25
    %s42 = sphi 0, %s26
    %s46 = sphi 0, %s46
    %s48 = sphi 0, %s46
    %s49 = sphi 0, %s48
    %s63 = sphi 0, %s49
    %s67 = sphi 0, %s67
    %s69 = sphi 0, %s67
    %s70 = sphi 0, %s69
    %s84 = sphi 0, %s70
    %s88 = sphi 0, %s88
    %s90 = sphi 0, %s88
    %s91 = sphi 0, %s90
    %s105 = sphi 0, %s91
    %s109 = sphi 0, %s109
    %s111 = sphi 0, %s109
    %s112 = sphi 0, %s111
    %s126 = sphi 0, %s112
    %s130 = sphi 0, %s130
    %s132 = sphi 0, %s130
    %s133 = sphi 0, %s132
    %s147 = sphi 0, %s133
    %s153 = sphi 0, %s155
    %s156 = sphi 0, %s153
    %s157 = sphi 0, %s156
    %s173 = sphi 0, %s157
  $region4: #{basic_block_pallas.1} parent=0 // loop_header_branch
    %15 = sbr.rel (%p13) target = $region8
  $region5: #{basic_block_pallas.1} parent=0 // loop_body
    %s17 = ssub.s32 %s12, 1
    %s18 = ssub.s32 %s12, 2
    %s19 = sadd.s32 %s12, 1
    %s20 = ssub.s32 %s12, %s19
    %p21 = scmp.eq.s32.totalorder %s20, 0
    %s23 = sadd.s32 %s22, 1
    %s24 = scalar_select %p21, %s22, %s23
    %p27 = pneg %p21
    %p28 = scmp.eq.s32.totalorder %s12, 1
    %p29 = por %p27, %p28
    %p30 = scmp.ne.s32.totalorder %s22, %s25
    %p31 = scmp.eq.s32.totalorder %s12, 0
    %p32 = por %p30, %p31
    %p33 = scmp.ne.s32.totalorder %s22, %s25
    %p34 = scmp.eq.s32.totalorder %s17, 1
    %p35 = por %p33, %p34
    %p36 = scmp.ne.s32.totalorder %s25, %s26
    %p37 = scmp.eq.s32.totalorder %s17, 0
    %p38 = por %p36, %p37
    %p39 = scmp.ne.s32.totalorder %s25, %s26
    %p40 = scmp.eq.s32.totalorder %s18, 1
    %p41 = por %p39, %p40
    %p43 = scmp.ne.s32.totalorder %s26, %s42
    %p44 = scmp.eq.s32.totalorder %s18, 0
    %p45 = por %p43, %p44
    %s47 = sadd.s32 %s46, 1
    %p50 = scmp.eq.s32.totalorder %s12, 1
    %p51 = scmp.ne.s32.totalorder %s46, %s48
    %p52 = scmp.eq.s32.totalorder %s12, 0
    %p53 = por %p51, %p52
    %p54 = scmp.ne.s32.totalorder %s46, %s48
    %p55 = scmp.eq.s32.totalorder %s17, 1
    %p56 = por %p54, %p55
    %p57 = scmp.ne.s32.totalorder %s48, %s49
    %p58 = scmp.eq.s32.totalorder %s17, 0
    %p59 = por %p57, %p58
    %p60 = scmp.ne.s32.totalorder %s48, %s49
    %p61 = scmp.eq.s32.totalorder %s18, 1
    %p62 = por %p60, %p61
    %p64 = scmp.ne.s32.totalorder %s49, %s63
    %p65 = scmp.eq.s32.totalorder %s18, 0
    %p66 = por %p64, %p65
    %s68 = sadd.s32 %s67, 1
    %p71 = scmp.eq.s32.totalorder %s12, 1
    %p72 = scmp.ne.s32.totalorder %s67, %s69
    %p73 = scmp.eq.s32.totalorder %s12, 0
    %p74 = por %p72, %p73
    %p75 = scmp.ne.s32.totalorder %s67, %s69
    %p76 = scmp.eq.s32.totalorder %s17, 1
    %p77 = por %p75, %p76
    %p78 = scmp.ne.s32.totalorder %s69, %s70
    %p79 = scmp.eq.s32.totalorder %s17, 0
    %p80 = por %p78, %p79
    %p81 = scmp.ne.s32.totalorder %s69, %s70
    %p82 = scmp.eq.s32.totalorder %s18, 1
    %p83 = por %p81, %p82
    %p85 = scmp.ne.s32.totalorder %s70, %s84
    %p86 = scmp.eq.s32.totalorder %s18, 0
    %p87 = por %p85, %p86
    %s89 = sadd.s32 %s88, 1
    %p92 = scmp.eq.s32.totalorder %s12, 1
    %p93 = scmp.ne.s32.totalorder %s88, %s90
    %p94 = scmp.eq.s32.totalorder %s12, 0
    %p95 = por %p93, %p94
    %p96 = scmp.ne.s32.totalorder %s88, %s90
    %p97 = scmp.eq.s32.totalorder %s17, 1
    %p98 = por %p96, %p97
    %p99 = scmp.ne.s32.totalorder %s90, %s91
    %p100 = scmp.eq.s32.totalorder %s17, 0
    %p101 = por %p99, %p100
    %p102 = scmp.ne.s32.totalorder %s90, %s91
    %p103 = scmp.eq.s32.totalorder %s18, 1
    %p104 = por %p102, %p103
    %p106 = scmp.ne.s32.totalorder %s91, %s105
    %p107 = scmp.eq.s32.totalorder %s18, 0
    %p108 = por %p106, %p107
    %s110 = sadd.s32 %s109, 1
    %p113 = scmp.eq.s32.totalorder %s12, 1
    %p114 = scmp.ne.s32.totalorder %s109, %s111
    %p115 = scmp.eq.s32.totalorder %s12, 0
    %p116 = por %p114, %p115
    %p117 = scmp.ne.s32.totalorder %s109, %s111
    %p118 = scmp.eq.s32.totalorder %s17, 1
    %p119 = por %p117, %p118
    %p120 = scmp.ne.s32.totalorder %s111, %s112
    %p121 = scmp.eq.s32.totalorder %s17, 0
    %p122 = por %p120, %p121
    %p123 = scmp.ne.s32.totalorder %s111, %s112
    %p124 = scmp.eq.s32.totalorder %s18, 1
    %p125 = por %p123, %p124
    %p127 = scmp.ne.s32.totalorder %s112, %s126
    %p128 = scmp.eq.s32.totalorder %s18, 0
    %p129 = por %p127, %p128
    %s131 = sadd.s32 %s130, 1
    %p134 = scmp.eq.s32.totalorder %s12, 1
    %p135 = scmp.ne.s32.totalorder %s130, %s132
    %p136 = scmp.eq.s32.totalorder %s12, 0
    %p137 = por %p135, %p136
    %p138 = scmp.ne.s32.totalorder %s130, %s132
    %p139 = scmp.eq.s32.totalorder %s17, 1
    %p140 = por %p138, %p139
    %p141 = scmp.ne.s32.totalorder %s132, %s133
    %p142 = scmp.eq.s32.totalorder %s17, 0
    %p143 = por %p141, %p142
    %p144 = scmp.ne.s32.totalorder %s132, %s133
    %p145 = scmp.eq.s32.totalorder %s18, 1
    %p146 = por %p144, %p145
    %p148 = scmp.ne.s32.totalorder %s133, %s147
    %p149 = scmp.eq.s32.totalorder %s18, 0
    %p150 = por %p148, %p149
    %s151 = ssub.s32 %s12, %s19
    %p152 = scmp.eq.s32.totalorder %s151, 0
    %s154 = sadd.s32 %s153, 1
    %s155 = scalar_select %p152, %s153, %s154
    %p158 = pneg %p152
    %p159 = scmp.eq.s32.totalorder %s12, 1
    %p160 = por %p158, %p159
    %p161 = scmp.ne.s32.totalorder %s153, %s156
    %p162 = scmp.eq.s32.totalorder %s12, 0
    %p163 = por %p161, %p162
    %p164 = scmp.ne.s32.totalorder %s153, %s156
    %p165 = scmp.eq.s32.totalorder %s17, 1
    %p166 = por %p164, %p165
    %p167 = scmp.ne.s32.totalorder %s156, %s157
    %p168 = scmp.eq.s32.totalorder %s17, 0
    %p169 = por %p167, %p168
    %p170 = scmp.ne.s32.totalorder %s156, %s157
    %p171 = scmp.eq.s32.totalorder %s18, 1
    %p172 = por %p170, %p171
    %p174 = scmp.ne.s32.totalorder %s157, %s173
    %p175 = scmp.eq.s32.totalorder %s18, 0
    %p176 = por %p174, %p175
    %p177 = scmp.le.s32.totalorder 1, %s12
    %p178 = scmp.lt.s32.totalorder %s12, 3
    %p179 = pnand %p177, %p178
    %p180 = pneg %p179
    // Predicated region
    $region9: #{basic_block_pallas.1} parent=5 // pred_check
      _
    $region10: #{basic_block_pallas.1} parent=5 // pred_check_branch
      %182 = sbr.rel (%p179) target = $region12
    $region11: #{basic_block_pallas.1} parent=5 // pred_region
      %s183 = ssub.s32 %s12, 1
      // Predicated region
      $region13: #{basic_block_pallas.1} parent=11 // pred_check
        %p184 = pneg %p59
      $region14: #{basic_block_pallas.1} parent=11 // pred_check_branch
        %186 = sbr.rel (%p184) target = $region16
      $region15: #{basic_block_pallas.1} parent=11 // pred_region
        _
      $region16: #{basic_block_pallas.1} parent=11 // pred_fallthru
        _
      // Predicated region
      $region17: #{basic_block_pallas.1} parent=11 // pred_check
        %p187 = pneg %p80
      $region18: #{basic_block_pallas.1} parent=11 // pred_check_branch
        %189 = sbr.rel (%p187) target = $region20
      $region19: #{basic_block_pallas.1} parent=11 // pred_region
        _
      $region20: #{basic_block_pallas.1} parent=11 // pred_fallthru
        _
      // Predicated region
      $region21: #{basic_block_pallas.1} parent=11 // pred_check
        %p190 = pneg %p101
      $region22: #{basic_block_pallas.1} parent=11 // pred_check_branch
        %192 = sbr.rel (%p190) target = $region24
      $region23: #{basic_block_pallas.1} parent=11 // pred_region
        _
      $region24: #{basic_block_pallas.1} parent=11 // pred_fallthru
        _
      // Predicated region
      $region25: #{basic_block_pallas.1} parent=11 // pred_check
        %p193 = pneg %p122
      $region26: #{basic_block_pallas.1} parent=11 // pred_check_branch
        %195 = sbr.rel (%p193) target = $region28
      $region27: #{basic_block_pallas.1} parent=11 // pred_region
        _
      $region28: #{basic_block_pallas.1} parent=11 // pred_fallthru
        _
      // Predicated region
      $region29: #{basic_block_pallas.1} parent=11 // pred_check
        %p196 = pneg %p143
      $region30: #{basic_block_pallas.1} parent=11 // pred_check_branch
        %198 = sbr.rel (%p196) target = $region32
      $region31: #{basic_block_pallas.1} parent=11 // pred_region
        _
      $region32: #{basic_block_pallas.1} parent=11 // pred_fallthru
        _
    $region12: #{basic_block_pallas.1} parent=5 // pred_fallthru
      _
    %p199 = scmp.lt.s32.totalorder %s12, 2
    // Predicated region
    $region33: #{basic_block_pallas.1} parent=5 // pred_check
      %p200 = pneg %p199
    $region34: #{basic_block_pallas.1} parent=5 // pred_check_branch
      %202 = sbr.rel (%p200) target = $region36
    $region35: #{basic_block_pallas.1} parent=5 // pred_region
      // Predicated region
      $region37: #{basic_block_pallas.1} parent=35 // pred_check
        %p203 = pneg %p32
      $region38: #{basic_block_pallas.1} parent=35 // pred_check_branch
        %205 = sbr.rel (%p203) target = $region40
      $region39: #{basic_block_pallas.1} parent=35 // pred_region
        %s206 = smul.u32 2, %s12
        %p207 = scmp.lt.s32.totalorder %s206, 3
        %s208 = scalar_select %p207, %s206, 3
        %s209 = smul.addr %s208, 4
        %s210 = scalar_lea.vmem %s0, %s209
        %s211 = smul.u32 2, %s12
      $region40: #{basic_block_pallas.1} parent=35 // pred_fallthru
        _
    $region36: #{basic_block_pallas.1} parent=5 // pred_fallthru
      _
    %p212 = scmp.le.s32.totalorder 1, %s12
    %p213 = scmp.lt.s32.totalorder %s12, 3
    %p214 = pnand %p212, %p213
    %p215 = pneg %p214
    // Predicated region
    $region41: #{basic_block_pallas.1} parent=5 // pred_check
      _
    $region42: #{basic_block_pallas.1} parent=5 // pred_check_branch
      %217 = sbr.rel (%p214) target = $region44
    $region43: #{basic_block_pallas.1} parent=5 // pred_region
      %s218 = ssub.s32 %s12, 1
      %s219 = smul.u32 2, %s17
      %p220 = scmp.lt.s32.totalorder %s219, 3
      %s221 = scalar_select %p220, %s219, 3
      %s222 = smul.addr %s221, 4
      %s223 = scalar_lea.vmem %s0, %s222
      %p224 = pneg %p38
      %p225 = pneg %p35
      %p226 = pneg %p59
      %p227 = pneg %p56
      %p228 = pneg %p80
      %p229 = pneg %p77
      %p230 = pneg %p101
      %p231 = pneg %p98
      %p232 = pneg %p122
      %p233 = pneg %p119
      %p234 = pneg %p143
      %p235 = pneg %p140
      %p236 = pneg %p169
      %p237 = pneg %p166
      %s238 = smul.u32 2, %s17
      %p239 = scmp.lt.s32.totalorder %s238, 3
      %s240 = scalar_select %p239, %s238, 3
      %s241 = smul.addr %s240, 8
      %s242 = scalar_lea.vmem %s6, %s241
      %s243 = smul.u32 2, %s17
      %p244 = scmp.lt.s32.totalorder %s243, 3
      %s245 = scalar_select %p244, %s243, 3
      %s246 = smul.addr %s245, 4
      %s247 = scalar_lea.vmem %s0, %s246
      %s248 = smul.u32 2, %s17
      %s249 = smul.u32 2, %s17
      %p250 = scmp.lt.s32.totalorder %s249, 3
      %s251 = scalar_select %p250, %s249, 3
      %s252 = smul.addr %s251, 8
      %s253 = scalar_lea.vmem %s6, %s252
      %s254 = smul.u32 2, %s17
      %v255 = vld [vmem:[%s247] sm:$0xff]
      %v256 = vld [vmem:[%s1] sm:$0xff]
      %v257 = vld [vmem:[%s1 + $0x8] sm:$0xff]
      %v258 = vld [vmem:[%s1 + $0x10] sm:$0x1]
      %v259 = vld [vmem:[%s1 + $0x18] sm:$0x1]
      %v260 = vld [vmem:[%s5] sm:$0xff]
      %v262 = vcombine.high %v255, %v255
      %263 = vrot.lane.b32.xlu0 %v262, 17
      %v264 = vpop.permute.xlu0 %263
      %266 = vrot.lane.b32.xlu0 %v255, 17
      %v267 = vpop.permute.xlu0 %266
      %vm268 = vcmask 138240
      %v269 = vsel %vm268, %v267, %v264
      %v272 = vsel %vm268, %v264, %v267
      %v273 = vlaneseq
      %v274 = vshrl.u32 %v273, 7
      %v275 = vsub.s32 0, %v274
      %v276 = vrot.slane %v256, %v275
      %v277 = vlaneseq
      %v278 = vshrl.u32 %v277, 7
      %v279 = vsub.s32 0, %v278
      %v280 = vrot.slane %v257, %v279
      %v281 = vmul.f32 %v272, %v276
      %v282 = vmul.f32 %v269, %v280
      %283 = vrot.lane.b32.xlu0 %v262, 16
      %v284 = vpop.permute.xlu0 %283
      %286 = vrot.lane.b32.xlu0 %v255, 16
      %v287 = vpop.permute.xlu0 %286
      %vm288 = vcmask 130048
      %v289 = vsel %vm288, %v287, %v284
      %v292 = vsel %vm288, %v284, %v287
      %v293 = vlaneseq
      %v294 = vshrl.u32 %v293, 7
      %v295 = vsub.s32 1, %v294
      %v296 = vrot.slane %v256, %v295
      %v297 = vlaneseq
      %v298 = vshrl.u32 %v297, 7
      %v299 = vsub.s32 1, %v298
      %v300 = vrot.slane %v257, %v299
      %v301 = vmul.f32 %v292, %v296
      %v302 = vmul.f32 %v289, %v300
      %303 = vrot.lane.b32.xlu0 %v262, 15
      %v304 = vpop.permute.xlu0 %303
      %306 = vrot.lane.b32.xlu0 %v255, 15
      %v307 = vpop.permute.xlu0 %306
      %vm308 = vcmask 121856
      %v309 = vsel %vm308, %v307, %v304
      %v312 = vsel %vm308, %v304, %v307
      %v313 = vlaneseq
      %v314 = vshrl.u32 %v313, 7
      %v315 = vsub.s32 2, %v314
      %v316 = vrot.slane %v256, %v315
      %v317 = vlaneseq
      %v318 = vshrl.u32 %v317, 7
      %v319 = vsub.s32 2, %v318
      %v320 = vrot.slane %v257, %v319
      %v321 = vmul.f32 %v312, %v316
      %v322 = vmul.f32 %v309, %v320
      %323 = vrot.lane.b32.xlu0 %v262, 1
      %v324 = vpop.permute.xlu0 %323
      %326 = vrot.lane.b32.xlu0 %v255, 1
      %v327 = vpop.permute.xlu0 %326
      %vm328 = vcmask 7168
      %v329 = vsel %vm328, %v327, %v324
      %v332 = vsel %vm328, %v324, %v327
      %v333 = vlaneseq
      %v334 = vshrl.u32 %v333, 7
      %v335 = vsub.s32 3, %v334
      %v336 = vrot.slane %v256, %v335
      %v337 = vlaneseq
      %v338 = vshrl.u32 %v337, 7
      %v339 = vsub.s32 3, %v338
      %v340 = vrot.slane %v257, %v339
      %v341 = vmul.f32 %v332, %v336
      %v342 = vmul.f32 %v329, %v340
      %343 = vrot.lane.b32.xlu0 %v255, 127
      %v344 = vpop.permute.xlu0 %343
      %345 = vrot.lane.b32.xlu0 %v262, 127
      %v346 = vpop.permute.xlu0 %345
      %vm347 = vcmask 1039360
      %v348 = vsel %vm347, %v344, %v346
      %v352 = vsel %vm347, %v346, %v344
      %v353 = vlaneseq
      %v354 = vshrl.u32 %v353, 7
      %v355 = vsub.s32 5, %v354
      %v356 = vrot.slane %v256, %v355
      %v357 = vlaneseq
      %v358 = vshrl.u32 %v357, 7
      %v359 = vsub.s32 5, %v358
      %v360 = vrot.slane %v257, %v359
      %v361 = vmul.f32 %v348, %v356
      %v362 = vmul.f32 %v352, %v360
      %363 = vrot.lane.b32.xlu0 %v255, 113
      %v364 = vpop.permute.xlu0 %363
      %365 = vrot.lane.b32.xlu0 %v262, 113
      %v366 = vpop.permute.xlu0 %365
      %vm367 = vcmask 924672
      %v368 = vsel %vm367, %v364, %v366
      %v372 = vsel %vm367, %v366, %v364
      %v373 = vlaneseq
      %v374 = vshrl.u32 %v373, 7
      %v375 = vsub.s32 6, %v374
      %v376 = vrot.slane %v256, %v375
      %v377 = vlaneseq
      %v378 = vshrl.u32 %v377, 7
      %v379 = vsub.s32 6, %v378
      %v380 = vrot.slane %v257, %v379
      %v381 = vmul.f32 %v368, %v376
      %v382 = vmul.f32 %v372, %v380
      %383 = vrot.lane.b32.xlu0 %v255, 112
      %v384 = vpop.permute.xlu0 %383
      %385 = vrot.lane.b32.xlu0 %v262, 112
      %v386 = vpop.permute.xlu0 %385
      %vm387 = vcmask 916480
      %v388 = vsel %vm387, %v384, %v386
      %v392 = vsel %vm387, %v386, %v384
      %v393 = vlaneseq
      %v394 = vshrl.u32 %v393, 7
      %v395 = vsub.s32 7, %v394
      %v396 = vrot.slane %v256, %v395
      %v397 = vlaneseq
      %v398 = vshrl.u32 %v397, 7
      %v399 = vsub.s32 7, %v398
      %v400 = vrot.slane %v257, %v399
      %v401 = vmul.f32 %v388, %v396
      %v402 = vmul.f32 %v392, %v400
      %403 = vrot.lane.b32.xlu0 %v255, 111
      %v404 = vpop.permute.xlu0 %403
      %405 = vrot.lane.b32.xlu0 %v262, 111
      %v406 = vpop.permute.xlu0 %405
      %vm407 = vcmask 908288
      %v408 = vsel %vm407, %v404, %v406
      %v412 = vsel %vm407, %v406, %v404
      %v413 = vlaneseq
      %v414 = vshrl.u32 %v413, 7
      %v415 = vsub.s32 0, %v414
      %v416 = vrot.slane %v258, %v415
      %v417 = vlaneseq
      %v418 = vshrl.u32 %v417, 7
      %v419 = vsub.s32 0, %v418
      %v420 = vrot.slane %v259, %v419
      %v421 = vmul.f32 %v408, %v416
      %v422 = vmul.f32 %v412, %v420
      %v425 = vrot.slane %v301, 4
      %v426 = vrot.slane %v302, 4
      %v431 = vrot.slane %v341, 4
      %v432 = vrot.slane %v342, 4
      %v438 = vrot.slane %v361, 4
      %v439 = vrot.slane %v362, 4
      %v444 = vrot.slane %v401, 4
      %v445 = vrot.slane %v402, 4
      %vm448 = vcmask 1043456
      %v449 = vsel %vm448, %v281, %v425
      %v450 = vsel %vm448, %v282, %v426
      %v451 = vsel %vm448, %v321, %v431
      %v452 = vsel %vm448, %v322, %v432
      %v453 = vsel %vm448, %v255, %v438
      %v454 = vsel %vm448, %v262, %v439
      %v455 = vsel %vm448, %v381, %v444
      %v456 = vsel %vm448, %v382, %v445
      %v457 = vld [vmem:[%s2] sm:$0xff]
      %459 = vset.pattern.permute.xlu0 0
      %460 = vperm.xlu0 %459, %v260
      %v461 = vpop.permute.xlu0 %460
      %vm463 = vcmask 293888
      %v465 = vsel %vm463, %v457, 0
      %v468 = vsel %vm448, %v421, 0
      %v471 = vsel %vm448, %v422, 0
      %473 = vmatprep.subr.mxu0 %v450
      %474 = vmatpush1.msra.mxu0 %v449
      %475 = vmatprep.subr.mxu0 %v452
      %476 = vmatpush1.msra.mxu0 %v451
      %477 = vmatprep.subr.mxu0 %v454
      %478 = vmatpush1.msra.mxu0 %v453
      %479 = vmatprep.subr.mxu0 %v456
      %480 = vmatpush1.msra.mxu0 %v455
      %481 = vmatprep.subr.mxu0 %v471
      %482 = vmatpush1.msra.mxu0 %v468
      %483 = vmatprep.subr.mxu0 0.0
      %484 = vmatpush1.msra.mxu0 0.0
      %485 = vmatprep.subr.mxu0 0.0
      %486 = vmatpush1.msra.mxu0 0.0
      %487 = vmatprep.subr.mxu0 0.0
      %488 = vmatpush1.msra.mxu0 0.0
      %489 = vmatprep.subr.mxu0 0.0
      %490 = vmatpush1.msra.mxu0 0.0
      %491 = vmatprep.subr.mxu0 0.0
      %492 = vmatpush1.msra.mxu0 0.0
      %493 = vmatprep.subr.mxu0 0.0
      %494 = vmatpush1.msra.mxu0 0.0
      %495 = vmatprep.subr.mxu0 0.0
      %496 = vmatpush1.msra.mxu0 0.0
      %497 = vmatprep.subr.mxu0 0.0
      %498 = vmatpush1.msra.mxu0 0.0
      %499 = vmatprep.subr.mxu0 0.0
      %500 = vmatpush1.msra.mxu0 0.0
      %501 = vmatprep.subr.mxu0 0.0
      %502 = vmatpush1.msra.mxu0 0.0
      %503 = vmatprep.subr.mxu0 0.0
      %504 = vmatpush1.msra.mxu0 0.0
      %505 = vmatprep.subr.mxu0 0.0
      %506 = vmatpush1.msra.mxu0 0.0
      %507 = vmatprep.subr.mxu0 0.0
      %508 = vmatpush1.msra.mxu0 0.0
      %509 = vmatprep.subr.mxu0 0.0
      %510 = vmatpush1.msra.mxu0 0.0
      %511 = vmatprep.subr.mxu0 0.0
      %512 = vmatpush1.msra.mxu0 0.0
      %513 = vmatprep.subr.mxu0 0.0
      %514 = vmatpush1.msra.mxu0 0.0
      %515 = vmatprep.subr.mxu0 0.0
      %516 = vmatpush1.msra.mxu0 0.0
      %517 = vmatprep.subr.mxu0 0.0
      %518 = vmatpush1.msra.mxu0 0.0
      %519 = vmatprep.subr.mxu0 0.0
      %520 = vmatpush1.msra.mxu0 0.0
      %521 = vmatprep.subr.mxu0 0.0
      %522 = vmatpush1.msra.mxu0 0.0
      %523 = vmatprep.subr.mxu0 0.0
      %524 = vmatpush1.msra.mxu0 0.0
      %525 = vmatprep.subr.mxu0 0.0
      %526 = vmatpush1.msra.mxu0 0.0
      %527 = vmatprep.subr.mxu0 0.0
      %528 = vmatpush1.msra.mxu0 0.0
      %529 = vmatprep.subr.mxu0 0.0
      %530 = vmatpush1.msra.mxu0 0.0
      %531 = vmatprep.subr.mxu0 0.0
      %532 = vmatpush1.msra.mxu0 0.0
      %533 = vmatprep.subr.mxu0 0.0
      %534 = vmatpush1.msra.mxu0 0.0
      %535 = vmatprep.subr.mxu0 0.0
      %536 = vmatpush1.msra.mxu0 0.0
      %537 = vmatprep.mubr.f32.mxu0 0.0
      %538 = vmatmul.mubr.f32.gmra.mrb[0].mxu0 %v465
      %v539 = vpop.f32.mrb[0].mxu0
      %v540 = vadd.f32 %v461, %v539
      %v541 = vpop.f32.mrb[0].mxu0
      %v542 = vadd.f32 %v461, %v541
      %543 = vdwg.mxu0
      %v544 = vmax.f32 %v540, 0.0
      %v545 = vmax.f32 %v542, 0.0
      %547 = vrot.lane.b32.xlu0 %v545, 17
      %v548 = vpop.permute.xlu0 %547
      %551 = vrot.lane.b32.xlu0 %v544, 17
      %v552 = vpop.permute.xlu0 %551
      %v553 = vsel %vm268, %v552, %v548
      %v556 = vsel %vm268, %v548, %v552
      %v557 = vmul.f32 %v556, %v276
      %v558 = vmul.f32 %v553, %v280
      %559 = vrot.lane.b32.xlu0 %v545, 16
      %v560 = vpop.permute.xlu0 %559
      %562 = vrot.lane.b32.xlu0 %v544, 16
      %v563 = vpop.permute.xlu0 %562
      %v564 = vsel %vm288, %v563, %v560
      %v567 = vsel %vm288, %v560, %v563
      %v568 = vmul.f32 %v567, %v296
      %v569 = vmul.f32 %v564, %v300
      %570 = vrot.lane.b32.xlu0 %v545, 15
      %v571 = vpop.permute.xlu0 %570
      %573 = vrot.lane.b32.xlu0 %v544, 15
      %v574 = vpop.permute.xlu0 %573
      %v575 = vsel %vm308, %v574, %v571
      %v578 = vsel %vm308, %v571, %v574
      %v579 = vmul.f32 %v578, %v316
      %v580 = vmul.f32 %v575, %v320
      %581 = vrot.lane.b32.xlu0 %v545, 1
      %v582 = vpop.permute.xlu0 %581
      %584 = vrot.lane.b32.xlu0 %v544, 1
      %v585 = vpop.permute.xlu0 %584
      %v586 = vsel %vm328, %v585, %v582
      %v589 = vsel %vm328, %v582, %v585
      %v590 = vmul.f32 %v589, %v336
      %v591 = vmul.f32 %v586, %v340
      %592 = vrot.lane.b32.xlu0 %v544, 127
      %v593 = vpop.permute.xlu0 %592
      %594 = vrot.lane.b32.xlu0 %v545, 127
      %v595 = vpop.permute.xlu0 %594
      %v596 = vsel %vm347, %v593, %v595
      %v600 = vsel %vm347, %v595, %v593
      %v601 = vmul.f32 %v596, %v356
      %v602 = vmul.f32 %v600, %v360
      %603 = vrot.lane.b32.xlu0 %v544, 113
      %v604 = vpop.permute.xlu0 %603
      %605 = vrot.lane.b32.xlu0 %v545, 113
      %v606 = vpop.permute.xlu0 %605
      %v607 = vsel %vm367, %v604, %v606
      %v611 = vsel %vm367, %v606, %v604
      %v612 = vmul.f32 %v607, %v376
      %v613 = vmul.f32 %v611, %v380
      %614 = vrot.lane.b32.xlu0 %v544, 112
      %v615 = vpop.permute.xlu0 %614
      %616 = vrot.lane.b32.xlu0 %v545, 112
      %v617 = vpop.permute.xlu0 %616
      %v618 = vsel %vm387, %v615, %v617
      %v622 = vsel %vm387, %v617, %v615
      %v623 = vmul.f32 %v618, %v396
      %v624 = vmul.f32 %v622, %v400
      %625 = vrot.lane.b32.xlu0 %v544, 111
      %v626 = vpop.permute.xlu0 %625
      %627 = vrot.lane.b32.xlu0 %v545, 111
      %v628 = vpop.permute.xlu0 %627
      %v629 = vsel %vm407, %v626, %v628
      %v633 = vsel %vm407, %v628, %v626
      %v634 = vmul.f32 %v629, %v416
      %v635 = vmul.f32 %v633, %v420
      %v636 = vld [vmem:[%s3] sm:$0xff]
      %637 = vset.pattern.permute.xlu0 1
      %638 = vperm.xlu0 %637, %v260
      %v639 = vpop.permute.xlu0 %638
      %vm641 = vcmask 588800
      %v643 = vsel %vm641, %v636, 0
      %645 = vmatprep.subr.mxu0 %v558
      %646 = vmatpush1.msra.mxu0 %v557
      %647 = vmatprep.subr.mxu0 %v569
      %648 = vmatpush1.msra.mxu0 %v568
      %649 = vmatprep.subr.mxu0 %v580
      %650 = vmatpush1.msra.mxu0 %v579
      %651 = vmatprep.subr.mxu0 %v591
      %652 = vmatpush1.msra.mxu0 %v590
      %653 = vmatprep.subr.mxu0 %v545
      %654 = vmatpush1.msra.mxu0 %v544
      %655 = vmatprep.subr.mxu0 %v602
      %656 = vmatpush1.msra.mxu0 %v601
      %657 = vmatprep.subr.mxu0 %v613
      %658 = vmatpush1.msra.mxu0 %v612
      %659 = vmatprep.subr.mxu0 %v624
      %660 = vmatpush1.msra.mxu0 %v623
      %661 = vmatprep.subr.mxu0 %v635
      %662 = vmatpush1.msra.mxu0 %v634
      %663 = vmatprep.subr.mxu0 0.0
      %664 = vmatpush1.msra.mxu0 0.0
      %665 = vmatprep.subr.mxu0 0.0
      %666 = vmatpush1.msra.mxu0 0.0
      %667 = vmatprep.subr.mxu0 0.0
      %668 = vmatpush1.msra.mxu0 0.0
      %669 = vmatprep.subr.mxu0 0.0
      %670 = vmatpush1.msra.mxu0 0.0
      %671 = vmatprep.subr.mxu0 0.0
      %672 = vmatpush1.msra.mxu0 0.0
      %673 = vmatprep.subr.mxu0 0.0
      %674 = vmatpush1.msra.mxu0 0.0
      %675 = vmatprep.subr.mxu0 0.0
      %676 = vmatpush1.msra.mxu0 0.0
      %677 = vmatprep.subr.mxu0 0.0
      %678 = vmatpush1.msra.mxu0 0.0
      %679 = vmatprep.subr.mxu0 0.0
      %680 = vmatpush1.msra.mxu0 0.0
      %681 = vmatprep.subr.mxu0 0.0
      %682 = vmatpush1.msra.mxu0 0.0
      %683 = vmatprep.subr.mxu0 0.0
      %684 = vmatpush1.msra.mxu0 0.0
      %685 = vmatprep.subr.mxu0 0.0
      %686 = vmatpush1.msra.mxu0 0.0
      %687 = vmatprep.subr.mxu0 0.0
      %688 = vmatpush1.msra.mxu0 0.0
      %689 = vmatprep.subr.mxu0 0.0
      %690 = vmatpush1.msra.mxu0 0.0
      %691 = vmatprep.subr.mxu0 0.0
      %692 = vmatpush1.msra.mxu0 0.0
      %693 = vmatprep.subr.mxu0 0.0
      %694 = vmatpush1.msra.mxu0 0.0
      %695 = vmatprep.subr.mxu0 0.0
      %696 = vmatpush1.msra.mxu0 0.0
      %697 = vmatprep.subr.mxu0 0.0
      %698 = vmatpush1.msra.mxu0 0.0
      %699 = vmatprep.subr.mxu0 0.0
      %700 = vmatpush1.msra.mxu0 0.0
      %701 = vmatprep.subr.mxu0 0.0
      %702 = vmatpush1.msra.mxu0 0.0
      %703 = vmatprep.subr.mxu0 0.0
      %704 = vmatpush1.msra.mxu0 0.0
      %705 = vmatprep.subr.mxu0 0.0
      %706 = vmatpush1.msra.mxu0 0.0
      %707 = vmatprep.subr.mxu0 0.0
      %708 = vmatpush1.msra.mxu0 0.0
      %709 = vmatprep.mubr.f32.mxu0 0.0
      %710 = vmatmul.mubr.f32.gmra.mrb[0].mxu0 %v643
      %v711 = vpop.f32.mrb[0].mxu0
      %v712 = vadd.f32 %v639, %v711
      %v713 = vpop.f32.mrb[0].mxu0
      %v714 = vadd.f32 %v639, %v713
      %715 = vdwg.mxu0
      %v716 = vld [vmem:[%s4] sm:$0xff]
      %717 = vset.pattern.permute.xlu0 2
      %718 = vperm.xlu0 %717, %v260
      %v719 = vpop.permute.xlu0 %718
      %vm721 = vcmask 31744
      %v723 = vsel %vm721, %v716, 0
      %v725 = vsel %vm448, %v255, 0
      %v727 = vsel %vm448, %v262, 0
      %729 = vmatprep.subr.mxu0 %v727
      %730 = vmatpush1.msra.mxu0 %v725
      %731 = vmatprep.subr.mxu0 0.0
      %732 = vmatpush1.msra.mxu0 0.0
      %733 = vmatprep.subr.mxu0 0.0
      %734 = vmatpush1.msra.mxu0 0.0
      %735 = vmatprep.subr.mxu0 0.0
      %736 = vmatpush1.msra.mxu0 0.0
      %737 = vmatprep.subr.mxu0 0.0
      %738 = vmatpush1.msra.mxu0 0.0
      %739 = vmatprep.subr.mxu0 0.0
      %740 = vmatpush1.msra.mxu0 0.0
      %741 = vmatprep.subr.mxu0 0.0
      %742 = vmatpush1.msra.mxu0 0.0
      %743 = vmatprep.subr.mxu0 0.0
      %744 = vmatpush1.msra.mxu0 0.0
      %745 = vmatprep.subr.mxu0 0.0
      %746 = vmatpush1.msra.mxu0 0.0
      %747 = vmatprep.subr.mxu0 0.0
      %748 = vmatpush1.msra.mxu0 0.0
      %749 = vmatprep.subr.mxu0 0.0
      %750 = vmatpush1.msra.mxu0 0.0
      %751 = vmatprep.subr.mxu0 0.0
      %752 = vmatpush1.msra.mxu0 0.0
      %753 = vmatprep.subr.mxu0 0.0
      %754 = vmatpush1.msra.mxu0 0.0
      %755 = vmatprep.subr.mxu0 0.0
      %756 = vmatpush1.msra.mxu0 0.0
      %757 = vmatprep.subr.mxu0 0.0
      %758 = vmatpush1.msra.mxu0 0.0
      %759 = vmatprep.subr.mxu0 0.0
      %760 = vmatpush1.msra.mxu0 0.0
      %761 = vmatprep.subr.mxu0 0.0
      %762 = vmatpush1.msra.mxu0 0.0
      %763 = vmatprep.subr.mxu0 0.0
      %764 = vmatpush1.msra.mxu0 0.0
      %765 = vmatprep.subr.mxu0 0.0
      %766 = vmatpush1.msra.mxu0 0.0
      %767 = vmatprep.subr.mxu0 0.0
      %768 = vmatpush1.msra.mxu0 0.0
      %769 = vmatprep.subr.mxu0 0.0
      %770 = vmatpush1.msra.mxu0 0.0
      %771 = vmatprep.subr.mxu0 0.0
      %772 = vmatpush1.msra.mxu0 0.0
      %773 = vmatprep.subr.mxu0 0.0
      %774 = vmatpush1.msra.mxu0 0.0
      %775 = vmatprep.subr.mxu0 0.0
      %776 = vmatpush1.msra.mxu0 0.0
      %777 = vmatprep.subr.mxu0 0.0
      %778 = vmatpush1.msra.mxu0 0.0
      %779 = vmatprep.subr.mxu0 0.0
      %780 = vmatpush1.msra.mxu0 0.0
      %781 = vmatprep.subr.mxu0 0.0
      %782 = vmatpush1.msra.mxu0 0.0
      %783 = vmatprep.subr.mxu0 0.0
      %784 = vmatpush1.msra.mxu0 0.0
      %785 = vmatprep.subr.mxu0 0.0
      %786 = vmatpush1.msra.mxu0 0.0
      %787 = vmatprep.subr.mxu0 0.0
      %788 = vmatpush1.msra.mxu0 0.0
      %789 = vmatprep.subr.mxu0 0.0
      %790 = vmatpush1.msra.mxu0 0.0
      %791 = vmatprep.subr.mxu0 0.0
      %792 = vmatpush1.msra.mxu0 0.0
      %793 = vmatprep.mubr.f32.mxu0 0.0
      %794 = vmatmul.mubr.f32.gmra.mrb[0].mxu0 %v723
      %v795 = vpop.f32.mrb[0].mxu0
      %v796 = vadd.f32 %v719, %v795
      %v797 = vpop.f32.mrb[0].mxu0
      %v798 = vadd.f32 %v719, %v797
      %799 = vdwg.mxu0
      %v800 = vadd.f32 %v712, %v796
      %v801 = vadd.f32 %v714, %v798
      %v802 = vmax.f32 %v800, 0.0
      %v803 = vmax.f32 %v801, 0.0
      %804 = vst [vmem:[%s253] sm:$0xff] %v802
      %805 = vst [vmem:[%s253 + $0x8] sm:$0xff] %v803
      %s806 = smul.u32 2, %s17
      %p807 = scmp.lt.s32.totalorder %s806, 3
      %s808 = scalar_select %p807, %s806, 3
      %s809 = smul.addr %s808, 8
      %s810 = scalar_lea.vmem %s6, %s809
      // Predicated region
      $region45: #{basic_block_pallas.1} parent=43 // pred_check
        %p811 = pneg %p166
      $region46: #{basic_block_pallas.1} parent=43 // pred_check_branch
        %813 = sbr.rel (%p811) target = $region48
      $region47: #{basic_block_pallas.1} parent=43 // pred_region
        %s814 = smul.u32 2, %s17
      $region48: #{basic_block_pallas.1} parent=43 // pred_fallthru
        _
    $region44: #{basic_block_pallas.1} parent=5 // pred_fallthru
      _
    %p815 = scmp.le.s32.totalorder 2, %s12
    // Predicated region
    $region49: #{basic_block_pallas.1} parent=5 // pred_check
      %p816 = pneg %p815
    $region50: #{basic_block_pallas.1} parent=5 // pred_check_branch
      %818 = sbr.rel (%p816) target = $region52
    $region51: #{basic_block_pallas.1} parent=5 // pred_region
      %s819 = ssub.s32 %s12, 2
      // Predicated region
      $region53: #{basic_block_pallas.1} parent=51 // pred_check
        %p820 = pneg %p172
      $region54: #{basic_block_pallas.1} parent=51 // pred_check_branch
        %822 = sbr.rel (%p820) target = $region56
      $region55: #{basic_block_pallas.1} parent=51 // pred_region
        %s823 = smul.u32 2, %s18
        %p824 = scmp.lt.s32.totalorder %s823, 3
        %s825 = scalar_select %p824, %s823, 3
        %s826 = smul.addr %s825, 8
        %s827 = scalar_lea.vmem %s6, %s826
      $region56: #{basic_block_pallas.1} parent=51 // pred_fallthru
        _
    $region52: #{basic_block_pallas.1} parent=5 // pred_fallthru
      _
  $region6: #{basic_block_pallas.1} parent=0 // loop_footer
    %s16 = sadd.s32 1, %s12
  $region7: #{basic_block_pallas.1} parent=0 // loop_footer_branch
    %11 = sbr.rel target = $region3
  $region8: #{basic_block_pallas.1} parent=0 // loop_exit
    _

</llo_original>
